<compile_context>
chip_gen: v7x
topology: tpu7x:2x2x1
jax: 0.10.0
libtpu: 0.0.40
codegen_flags: <defaults>
</compile_context>

<pallas_src>
import functools

import jax
import jax.numpy as jnp
from jax import lax
from jax.experimental import pallas as pl
from jax.experimental.pallas import tpu as pltpu


def _nll_partial_kernel(outputs_ref, targets_ref, out_ref, *, n_total):
    """One grid step: partial sum of outputs[i, targets[i]] over a row tile.

    outputs_ref : VMEM (tile_n, C) f32/bf16 log-probabilities
    targets_ref : VMEM (tile_n, 1) i32      class indices
    out_ref     : VMEM (1, 8, 128) f32      per-tile partial sum (broadcast)
    """
    i = pl.program_id(0)

    logp = outputs_ref[...]                      # native dtype (no full-tile cast)
    tn, c = logp.shape

    # Fold tail masking into the targets: rows past n_total get target -1,
    # which never matches any lane index.  This is (tile_n, 1) work only —
    # C x cheaper than a full-tile row iota + compare + AND.
    tgt = targets_ref[...]                       # (tile_n, 1) int32
    row = lax.broadcasted_iota(jnp.int32, (tn, 1), 0) + i * tn
    tgt = jnp.where(row < n_total, tgt, -1)

    # Hot path: one full-tile lane iota + compare + select, in the input dtype.
    # Select (not multiply) so NaN/Inf garbage in padded rows can't leak in.
    col = lax.broadcasted_iota(jnp.int32, (tn, c), 1)
    picked = jnp.where(col == tgt, logp, jnp.zeros((), logp.dtype))

    # Lane-axis reduce first (exact: at most one nonzero per row), then upcast
    # only the (tile_n, 1) row results to f32 for the final accumulation.
    row_sums = jnp.sum(picked, axis=-1, keepdims=True).astype(jnp.float32)
    partial = jnp.sum(row_sums)                  # f32 scalar

    # Lane-dense output block; wrapper reads [tile, 0, 0].
    out_ref[...] = jnp.full((1, 8, 128), partial, dtype=jnp.float32)


def _pick_tile_n(n, c, itemsize, target_bytes=4 * 1024 * 1024):
    """Row-tile size targeting ~4 MiB per outputs tile, with >=2 tiles when possible."""
    rows = target_bytes // max(1, c * itemsize)
    rows = max(16, (rows // 16) * 16)            # sublane-aligned (f32=8, bf16=16)
    if rows >= n:
        if n >= 32:
            # Would collapse to a single grid step: split in two so the
            # "parallel" grid axis feeds both v7x TensorCores.
            half = -(-((n + 1) // 2) // 16) * 16   # cdiv(cdiv(n,2),16)*16
            rows = half if half < n else n
        else:
            rows = n
    return int(rows)


def _round_tile(tile_n, n):
    tile_n = int(min(tile_n, n))
    if tile_n == n:
        return tile_n
    tile_n = max(16, (tile_n // 16) * 16)
    return n if tile_n >= n else tile_n


def elbo_loss(outputs, targets, kl, *, beta, num_params, tile_n=None):
    """ELBO = mean NLL + beta * kl / num_params (scalar f32).

    outputs: (N, C) f32 or bf16 log-probabilities
    targets: (N,)   integer class indices in [0, C)
    kl:      scalar KL divergence
    """
    n, c = outputs.shape
    itemsize = jnp.dtype(outputs.dtype).itemsize
    if tile_n is None:
        tile_n = _pick_tile_n(n, c, itemsize)
    tile_n = _round_tile(tile_n, n)
    num_tiles = pl.cdiv(n, tile_n)

    targets2d = targets.astype(jnp.int32).reshape(n, 1)

    # VMEM budget with padding accounted for (per pipeline buffer):
    #   outputs tile : tile_n x ceil(C/128)*128 x itemsize
    #   targets tile : tile_n x 128 x 4   ((tile_n, 1) block is lane-padded 128x)
    #   out block    : 8 x 128 x 4
    tn_pad = max(16, -(-tile_n // 16) * 16)
    c_pad = -(-c // 128) * 128
    per_buf = tn_pad * c_pad * itemsize + tn_pad * 128 * 4 + 8 * 128 * 4
    vmem_limit = int(min(64 * 2**20, max(8 * 2**20, 2 * per_buf + 4 * 2**20)))

    kernel = functools.partial(_nll_partial_kernel, n_total=n)

    cost = pl.CostEstimate(
        flops=2 * n * c,
        transcendentals=0,
        bytes_accessed=n * c * itemsize + n * 4 + num_tiles * 8 * 128 * 4,
    )

    partials = pl.pallas_call(
        kernel,
        out_shape=jax.ShapeDtypeStruct((num_tiles, 8, 128), jnp.float32),
        grid=(num_tiles,),
        in_specs=[
            pl.BlockSpec((tile_n, c), lambda i: (i, 0)),   # outputs row tile
            pl.BlockSpec((tile_n, 1), lambda i: (i, 0)),   # targets row tile
        ],
        out_specs=pl.BlockSpec((1, 8, 128), lambda i: (i, 0, 0)),
        compiler_params=pltpu.CompilerParams(
            dimension_semantics=("parallel",),             # megacore-shardable
            vmem_limit_bytes=vmem_limit,
        ),
        cost_estimate=cost,
    )(outputs, targets2d)

    # Tiny epilogue in the wrapper: global mean + KL term (added exactly once).
    picked_sum = jnp.sum(partials[:, 0, 0])
    nll_mean = -picked_sum / jnp.float32(n)
    scale = float(beta) / float(num_params)                # folded at trace time
    return nll_mean + jnp.float32(scale) * jnp.asarray(kl, jnp.float32)


if __name__ == "__main__":
    key = jax.random.PRNGKey(0)
    k_out, k_tgt, k_kl = jax.random.split(key, 3)

    # Small shapes: batch N=8, classes C=32.
    N, C = 8, 32

    # Synthetic "model" defining num_params deterministically:
    # a single linear layer hidden=32 -> classes=32  =>  32*32 + 32 params.
    HIDDEN = 32
    num_params = HIDDEN * C + C
    beta = 0.5
    train_size = 1000  # parity with the module's __init__ (unused in forward)

    logits = jax.random.normal(k_out, (N, C), dtype=jnp.float32)
    outputs = jax.nn.log_softmax(logits, axis=-1)
    targets = jax.random.randint(k_tgt, (N,), 0, C, dtype=jnp.int32)
    kl = jax.random.uniform(k_kl, (), dtype=jnp.float32) * 10.0

    loss = elbo_loss(outputs, targets, kl, beta=beta, num_params=num_params)
    loss = jax.block_until_ready(loss)

    # Pure-JAX reference (F.nll_loss semantics: -mean(outputs[i, t_i])).
    ref = -jnp.mean(outputs[jnp.arange(N), targets]) + beta * kl / num_params
    assert jnp.allclose(loss, ref, rtol=1e-6, atol=1e-6), (loss, ref)

    # Second check: multi-tile grid + tail masking + bf16 log-probs (bf16 kept
    # through the select / lane reduce).
    N2, C2 = 300, 128
    k2o, k2t, k2k = jax.random.split(jax.random.PRNGKey(1), 3)
    logits2 = jax.random.normal(k2o, (N2, C2), dtype=jnp.float32)
    outputs2 = jax.nn.log_softmax(logits2, axis=-1).astype(jnp.bfloat16)
    targets2 = jax.random.randint(k2t, (N2,), 0, C2, dtype=jnp.int32)
    kl2 = jax.random.uniform(k2k, (), dtype=jnp.float32) * 3.0

    loss2 = elbo_loss(outputs2, targets2, kl2, beta=beta,
                      num_params=num_params, tile_n=64)   # forces 5 grid steps
    loss2 = jax.block_until_ready(loss2)
    ref2 = (-jnp.mean(outputs2.astype(jnp.float32)[jnp.arange(N2), targets2])
            + beta * kl2 / num_params)
    assert jnp.allclose(loss2, ref2, rtol=1e-5, atol=1e-5), (loss2, ref2)

    # Third check: default (auto) tile pick splits a mid-sized N into >=2 tiles.
    loss2b = jax.block_until_ready(
        elbo_loss(outputs2, targets2, kl2, beta=beta, num_params=num_params))
    assert jnp.allclose(loss2b, ref2, rtol=1e-5, atol=1e-5), (loss2b, ref2)

    print("KERNEL_OK")
</pallas_src>

<mosaic_0001>
module attributes {stable_mosaic.version = 11 : i64} {
  func.func @_nll_partial_kernel(%arg0: i32, %arg1: memref<8x32xf32, #tpu.memory_space<vmem>>, %arg2: memref<8x1xi32, #tpu.memory_space<vmem>>, %arg3: memref<1x8x128xf32, #tpu.memory_space<vmem>>) attributes {dimension_semantics = [#tpu.dimension_semantics<parallel>], iteration_bounds = array<i64: 1>, scalar_prefetch = 0 : i64, scratch_operands = 0 : i64, tpu.core_type = #tpu.core_type<tc>, window_params = [{transform_indices = @transform_0, window_bounds = array<i64: 8, 32>}, {transform_indices = @transform_1, window_bounds = array<i64: 8, 1>}, {transform_indices = @transform_2, window_bounds = array<i64: 1, 8, 128>}]} {
    %c0 = arith.constant 0 : index
    %c0_0 = arith.constant 0 : index
    %0 = vector.load %arg1[%c0, %c0_0] : memref<8x32xf32, #tpu.memory_space<vmem>>, vector<8x32xf32>
    %c0_1 = arith.constant 0 : index
    %c0_2 = arith.constant 0 : index
    %1 = vector.load %arg2[%c0_1, %c0_2] : memref<8x1xi32, #tpu.memory_space<vmem>>, vector<8x1xi32>
    %2 = tpu.iota {dimensions = array<i32: 0>} : vector<8x1xi32>
    %c8_i32 = arith.constant 8 : i32
    %3 = arith.muli %arg0, %c8_i32 : i32
    %4 = vector.broadcast %3 : i32 to vector<8x1xi32>
    %5 = arith.addi %2, %4 : vector<8x1xi32>
    %c8_i32_3 = arith.constant 8 : i32
    %6 = vector.broadcast %c8_i32_3 : i32 to vector<8x1xi32>
    %7 = arith.cmpi slt, %5, %6 : vector<8x1xi32>
    %c-1_i32 = arith.constant -1 : i32
    %8 = vector.broadcast %c-1_i32 : i32 to vector<8x1xi32>
    %9 = arith.select %7, %1, %8 : vector<8x1xi1>, vector<8x1xi32>
    %10 = tpu.iota {dimensions = array<i32: 1>} : vector<8x32xi32>
    %11 = vector.broadcast %9 : vector<8x1xi32> to vector<8x32xi32>
    %12 = arith.cmpi eq, %10, %11 : vector<8x32xi32>
    %cst = arith.constant 0.000000e+00 : f32
    %13 = vector.broadcast %cst : f32 to vector<8x32xf32>
    %14 = arith.select %12, %0, %13 : vector<8x32xi1>, vector<8x32xf32>
    %cst_4 = arith.constant dense<0.000000e+00> : vector<8xf32>
    %15 = vector.multi_reduction <add>, %14, %cst_4 [1] : vector<8x32xf32> to vector<8xf32>
    %16 = vector.shape_cast %15 : vector<8xf32> to vector<8x1xf32>
    %17 = vector.shape_cast %16 : vector<8x1xf32> to vector<1x8x1xf32>
    %cst_5 = arith.constant dense<0.000000e+00> : vector<1xf32>
    %18 = vector.multi_reduction <add>, %17, %cst_5 [1, 2] : vector<1x8x1xf32> to vector<1xf32>
    %19 = vector.shape_cast %18 : vector<1xf32> to vector<1x1x1xf32>
    %20 = vector.extract %19[0, 0, 0] : f32 from vector<1x1x1xf32>
    %21 = vector.broadcast %20 : f32 to vector<1x8x128xf32>
    %c0_6 = arith.constant 0 : index
    %c0_7 = arith.constant 0 : index
    %c0_8 = arith.constant 0 : index
    %22 = vector.load %arg3[%c0_6, %c0_7, %c0_8] : memref<1x8x128xf32, #tpu.memory_space<vmem>>, vector<1x8x128xf32>
    tpu.vector_store %arg3[%c0_6, %c0_7, %c0_8], %21 {strides = array<i32>} : memref<1x8x128xf32, #tpu.memory_space<vmem>>, vector<1x8x128xf32>,
    return
  }
  func.func @transform_0(%arg0: i32) -> (i32, i32) {
    %c0_i32 = arith.constant 0 : i32
    %c0_i32_0 = arith.constant 0 : i32
    return %arg0, %c0_i32 : i32, i32
  }
  func.func @transform_1(%arg0: i32) -> (i32, i32) {
    %c0_i32 = arith.constant 0 : i32
    %c0_i32_0 = arith.constant 0 : i32
    return %arg0, %c0_i32 : i32, i32
  }
  func.func @transform_2(%arg0: i32) -> (i32, i32, i32) {
    %c0_i32 = arith.constant 0 : i32
    %c0_i32_0 = arith.constant 0 : i32
    %c0_i32_1 = arith.constant 0 : i32
    return %arg0, %c0_i32, %c0_i32_0 : i32, i32, i32
  }
}

</mosaic_0001>

<llo_original>
// kernel: tpu_custom_call.1
$region0: #{tpu_custom_call.1}
  #allocation0 [shape = 'u32[]', space=smem, size = 0x4, offset = 0x4, fixed_abs, tag = 'smem constant byte address 0x4 - core index']
  #allocation1 [shape = 'u32[144,128]{1,0:T(1,128)}', space=vmem, size = 0x12000, scoped, tag = 'internal scratch']
  %s0 = inlined_call_operand.vmem [shape: f32[8,32], index: 0, kind: input, shape index: {}]
  %s1 = inlined_call_operand.vmem [shape: s32[8,1], index: 1, kind: input, shape index: {}]
  %s2 = inlined_call_operand.hbm [shape: f32[1,8,128], index: 2, kind: output, shape index: {}]
  %s3 = sld [smem:[#allocation0]]
  $region18: #{tpu_custom_call.1} parent=0
    _
  %s5 = ssub.s32 1, %s3
  %s6 = scalar_select 0, %s5, %s3
  $region1: #{tpu_custom_call.1} parent=0
    #allocation2 [shape = 'u8[4096]{0}', space=vmem, size = 0x1000, scoped, tag = 'output window, operand 0, single buffered']
    #allocation3 [shape = 's32[1]{0}', space=sflag, size = 0x4, scoped, tag = 'scoped memory for tpu_custom_call.1']
    %7 = vsyncpa [#allocation3], 0
    // Predicated region
    $region2: #{tpu_custom_call.1} parent=1 // pred_check
      _
    $region3: #{tpu_custom_call.1} parent=1 // pred_check_branch
      %9 = sbr.rel (0) target = $region5
    $region4: #{tpu_custom_call.1} parent=1 // pred_region
      _
    $region5: #{tpu_custom_call.1} parent=1 // pred_fallthru
      _
    // Predicated region
    $region6: #{tpu_custom_call.1} parent=1 // pred_check
      _
    $region7: #{tpu_custom_call.1} parent=1 // pred_check_branch
      %11 = sbr.rel (0) target = $region9
    $region8: #{tpu_custom_call.1} parent=1 // pred_region
      _
    $region9: #{tpu_custom_call.1} parent=1 // pred_fallthru
      _
    %v12 = vld [vmem:[%s0] sm:$0xff]
    %v13 = vld [vmem:[%s1] sm:$0xff]
    %v14 = vlaneseq
    %v15 = vshrl.u32 %v14, 7
    %s16 = smul.u32 0, 8
    %v17 = vstv %s16
    %v18 = vadd.s32 %v15, %v17
    %vm19 = vcmp.lt.s32.totalorder %v18, 8
    %v20 = vsel %vm19, %v13, 4294967295
    %v21 = vlaneseq
    %v22 = vand.u32 %v21, 127
    %23 = vset.pattern.permute.xlu0 0
    %24 = vperm.xlu0 %23, %v20
    %v25 = vpop.permute.xlu0 %24
    %vm26 = vcmp.eq.s32.totalorder %v22, %v25
    %v27 = vsel %vm26, %v12, 0.0
    %vm28 = vcmask 261120
    %v29 = vsel %vm28, %v27, 0.0
    %30 = vadd.xlane.f32.xlu0 %v29
    %v31 = vpop.xlane.xlu0 %30
    %vm32 = vcmask 7168
    %v33 = vsel %vm32, %v31, 0.0
    %34 = vadd.xlane.f32.xlu0 %v33
    %v35 = vpop.xlane.xlu0 %34
    %v36 = vrot.slane %v35, 4
    %v37 = vadd.f32 %v35, %v36
    %v38 = vrot.slane %v37, 2
    %v39 = vadd.f32 %v37, %v38
    %v40 = vrot.slane %v39, 1
    %v41 = vadd.f32 %v39, %v40
    %s42 = vtos %v41
    %v43 = vstv %s42
    %44 = vst [vmem:[#allocation2] sm:$0xff] %v43
    // Predicated region
    $region10: #{tpu_custom_call.1} parent=1 // pred_check
      _
    $region11: #{tpu_custom_call.1} parent=1 // pred_check_branch
      %46 = sbr.rel (0) target = $region13
    $region12: #{tpu_custom_call.1} parent=1 // pred_region
      %s48 = ssub.s32 128, 128
      %49 = vsyncadd [#allocation3], %s48
      %s51 = sshll.u32 [#allocation2], 4
      %s52 = int_to_ptr.vmem [resolvable:$true] %s51
      %54 = dma.vmem_to_hbm [thread:$0]  %s52, 128, %s2, [#allocation3]
    $region13: #{tpu_custom_call.1} parent=1 // pred_fallthru
      _
    // Predicated region
    $region14: #{tpu_custom_call.1} parent=1 // pred_check
      _
    $region15: #{tpu_custom_call.1} parent=1 // pred_check_branch
      %56 = sbr.rel (0) target = $region17
    $region16: #{tpu_custom_call.1} parent=1 // pred_region
      %57 = dma.done [#allocation3], 128
    $region17: #{tpu_custom_call.1} parent=1 // pred_fallthru
      _
    %58 = vsyncpa [#allocation3], 1

</llo_original>
